<compile_context>
chip_gen: v6e
topology: v6e:2x2x1
jax: 0.10.0
libtpu: 0.0.40
codegen_flags: <defaults>
</compile_context>

<pallas_src>
import jax
import jax.numpy as jnp
from jax.experimental import pallas as pl
from jax.experimental.pallas import tpu as pltpu

# Lane-dense layout: last dim is a multiple of 128.
_COLS = 1024
# 512 rows x 1024 cols x 4B = 2 MiB per block -> 8 MiB total with
# double-buffered in+out; safe under the default scoped VMEM limit on
# v5e (16 MiB), v6e (32 MiB) and v7x (32 MiB scoped / 64 MiB physical).
_MAX_BLOCK_ROWS = 512
# Below ~1 MiB the fixed custom-call / pipeline-setup cost dominates and XLA's
# fused sigmoid is already at HBM roofline -> take the XLA path.
_MIN_KERNEL_ELEMS = 256 * 1024
# Keep at least this many grid steps (when the size permits) so the pipeline
# overlaps DMA/compute and the row axis can shard across both v7x TCs.
_MIN_GRID_STEPS = 4


def _round_up(x: int, m: int) -> int:
    return ((x + m - 1) // m) * m


def _sigmoid_kernel(x_ref, o_ref):
    # Widen in-register (v5e EUP/VPU has no bf16 path).  0.5*(1+tanh(x/2)) is
    # the exact, numerically stable logistic and issues a single EUP op per
    # element; the extra mul/add ride the otherwise-idle VALU slots, so the
    # kernel stays purely DMA/HBM-bound on all generations.
    x = x_ref[...].astype(jnp.float32)
    y = 0.5 * (jnp.tanh(0.5 * x) + 1.0)
    o_ref[...] = y.astype(o_ref.dtype)


def cow_forward(data_input: jax.Array) -> jax.Array:
    """Reproduces:  data_input.reshape(-1, 1, 2, 2) |> Sigmoid()."""
    n_total = int(data_input.size)

    # Tiny inputs: a Pallas custom call is pure overhead -> plain XLA sigmoid.
    if n_total < _MIN_KERNEL_ELEMS:
        return jax.nn.sigmoid(jnp.reshape(data_input, (-1, 1, 2, 2)))

    # Sublane alignment: 8 rows for 4-byte dtypes, 16 for bf16, 32 for int8.
    itemsize = jnp.dtype(data_input.dtype).itemsize
    sub = max(8, 32 // max(itemsize, 1))

    # One contiguous lane-dense slab; pad only the ragged tail up to a sublane
    # multiple of rows (<= sub-1 extra rows), never up to a full block.
    flat = jnp.ravel(data_input)
    rows = pl.cdiv(n_total, _COLS)
    padded_rows = _round_up(rows, sub)
    padded_total = padded_rows * _COLS
    padded = padded_total != n_total
    if padded:
        flat = jnp.pad(flat, (0, padded_total - n_total))
    x2d = flat.reshape(padded_rows, _COLS)

    # Block size: as large as allowed, but small enough that the grid has at
    # least _MIN_GRID_STEPS steps.  The last block may be partial; Pallas
    # masks the out-of-bounds rows.
    block_rows = min(
        _MAX_BLOCK_ROWS,
        _round_up(pl.cdiv(padded_rows, _MIN_GRID_STEPS), sub),
    )
    grid = (pl.cdiv(padded_rows, block_rows),)

    out2d = pl.pallas_call(
        _sigmoid_kernel,
        out_shape=jax.ShapeDtypeStruct(x2d.shape, x2d.dtype),
        grid=grid,
        in_specs=[pl.BlockSpec((block_rows, _COLS), lambda i: (i, 0))],
        out_specs=pl.BlockSpec((block_rows, _COLS), lambda i: (i, 0)),
        compiler_params=pltpu.CompilerParams(
            # Purely elementwise / mem-bound: shard the row axis across both
            # TensorCores on v7x.
            dimension_semantics=("parallel",),
        ),
        # NOTE: input_output_aliases={0: 0} would save one temp allocation but
        # risks donating a buffer that may alias the caller's array when run
        # eagerly; skipped for safety (zero bandwidth impact either way).
    )(x2d)

    out_flat = out2d.reshape(-1)
    if padded:
        out_flat = out_flat[:n_total]
    return out_flat.reshape(-1, 1, 2, 2)


if __name__ == "__main__":
    key = jax.random.PRNGKey(0)
    k1, k2 = jax.random.split(key)

    # Kernel path: ragged size just above the threshold exercises tail padding,
    # a partial last block and the output slice.  65600 x (1,2,2) = 262,400 f32
    # elements (~1 MiB).
    data_input = jax.random.normal(k1, (65600, 1, 2, 2), dtype=jnp.float32)
    out = cow_forward(data_input)
    jax.block_until_ready(out)

    ref = jax.nn.sigmoid(jnp.reshape(data_input, (-1, 1, 2, 2)))
    assert out.shape == ref.shape and out.dtype == ref.dtype
    assert jnp.max(jnp.abs(out - ref)) < 1e-5

    # Tiny-input fast path (pure XLA sigmoid) at a small spec-consistent shape.
    tiny = jax.random.normal(k2, (2, 1, 2, 2), dtype=jnp.float32)
    out_tiny = cow_forward(tiny)
    jax.block_until_ready(out_tiny)
    assert jnp.allclose(out_tiny, jax.nn.sigmoid(tiny), atol=1e-6, rtol=1e-6)

    print("KERNEL_OK")
</pallas_src>

<mosaic_0001>
module attributes {stable_mosaic.version = 11 : i64} {
  func.func @_sigmoid_kernel(%arg0: i32, %arg1: memref<72x1024xf32, #tpu.memory_space<vmem>>, %arg2: memref<72x1024xf32, #tpu.memory_space<vmem>>) attributes {dimension_semantics = [#tpu.dimension_semantics<parallel>], iteration_bounds = array<i64: 4>, scalar_prefetch = 0 : i64, scratch_operands = 0 : i64, tpu.core_type = #tpu.core_type<tc>, window_params = [{transform_indices = @transform_0, window_bounds = array<i64: 72, 1024>}, {transform_indices = @transform_1, window_bounds = array<i64: 72, 1024>}]} {
    %c0 = arith.constant 0 : index
    %c0_0 = arith.constant 0 : index
    %0 = vector.load %arg1[%c0, %c0_0] : memref<72x1024xf32, #tpu.memory_space<vmem>>, vector<72x1024xf32>
    %cst = arith.constant 5.000000e-01 : f32
    %1 = vector.broadcast %cst : f32 to vector<72x1024xf32>
    %2 = arith.mulf %1, %0 : vector<72x1024xf32>
    %3 = math.tanh %2 : vector<72x1024xf32>
    %cst_1 = arith.constant 1.000000e+00 : f32
    %4 = vector.broadcast %cst_1 : f32 to vector<72x1024xf32>
    %5 = arith.addf %3, %4 : vector<72x1024xf32>
    %cst_2 = arith.constant 5.000000e-01 : f32
    %6 = vector.broadcast %cst_2 : f32 to vector<72x1024xf32>
    %7 = arith.mulf %6, %5 : vector<72x1024xf32>
    %c0_3 = arith.constant 0 : index
    %c0_4 = arith.constant 0 : index
    %8 = vector.load %arg2[%c0_3, %c0_4] : memref<72x1024xf32, #tpu.memory_space<vmem>>, vector<72x1024xf32>
    tpu.vector_store %arg2[%c0_3, %c0_4], %7 {strides = array<i32>} : memref<72x1024xf32, #tpu.memory_space<vmem>>, vector<72x1024xf32>,
    return
  }
  func.func @transform_0(%arg0: i32) -> (i32, i32) {
    %c0_i32 = arith.constant 0 : i32
    %c0_i32_0 = arith.constant 0 : i32
    return %arg0, %c0_i32 : i32, i32
  }
  func.func @transform_1(%arg0: i32) -> (i32, i32) {
    %c0_i32 = arith.constant 0 : i32
    %c0_i32_0 = arith.constant 0 : i32
    return %arg0, %c0_i32 : i32, i32
  }
}

</mosaic_0001>

<llo_original>
// kernel: tpu_custom_call.1
$region0: #{tpu_custom_call.1}
  #allocation0 [shape = 'u32[]', space=smem, size = 0x4, offset = 0x4, fixed_abs, tag = 'smem constant byte address 0x4 - core index']
  #allocation1 [shape = 'u32[144,128]{1,0:T(1,128)}', space=vmem, size = 0x12000, scoped, tag = 'internal scratch']
  %s0 = inlined_call_operand.hbm [shape: f32[264,1024], index: 0, kind: input, shape index: {}]
  %s1 = inlined_call_operand.hbm [shape: f32[264,1024], index: 1, kind: output, shape index: {}]
  %s2 = sld [smem:[#allocation0]]
  $region41: #{tpu_custom_call.1} parent=0
    _
  %s4 = ssub.s32 1, %s2
  %s5 = scalar_select 0, %s4, %s2
  $region1: #{tpu_custom_call.1} parent=0
    #allocation2 [shape = 'u8[589824]{0}', space=vmem, size = 0x90000, scoped, tag = 'input window, operand 0']
    #allocation3 [shape = 's32[2]{0}', space=sflag, size = 0x8, scoped, tag = 'scoped memory for tpu_custom_call.1']
    #allocation4 [shape = 's32[2]{0}', space=sflag, size = 0x8, scoped, tag = 'scoped memory for tpu_custom_call.1']
    #allocation5 [shape = 'u8[589824]{0}', space=vmem, size = 0x90000, scoped, tag = 'output window, operand 0']
    %6 = vsyncpa [#allocation3], 0
    %s7 = scalar_lea.sflag [#allocation3], 1
    %8 = vsyncpa %s7, 0
    %9 = vsyncpa [#allocation4], 0
    %s10 = scalar_lea.sflag [#allocation4], 1
    %11 = vsyncpa %s10, 0
    loop: start=0, step=1, limit=6
    $region2: #{tpu_custom_call.1} parent=1 // loop_pre_header
      _
    $region3: #{tpu_custom_call.1} parent=1 // loop_header
      %s13 = sphi 0, %s17
      %p14 = scmp.ge.s32.totalorder %s13, 6
      %s23 = sphi 0, %s25
      %s26 = sphi 0, %s23
      %s27 = sphi 0, %s26
      %s43 = sphi 0, %s27
      %s49 = sphi 0, %s51
      %s52 = sphi 0, %s49
      %s53 = sphi 0, %s52
      %s69 = sphi 0, %s53
    $region4: #{tpu_custom_call.1} parent=1 // loop_header_branch
      %16 = sbr.rel (%p14) target = $region8
    $region5: #{tpu_custom_call.1} parent=1 // loop_body
      %s18 = ssub.s32 %s13, 1
      %s19 = ssub.s32 %s13, 2
      %s20 = sadd.s32 %s13, 1
      %s21 = ssub.s32 %s13, %s20
      %p22 = scmp.eq.s32.totalorder %s21, 0
      %s24 = sadd.s32 %s23, 1
      %s25 = scalar_select %p22, %s23, %s24
      %p28 = pneg %p22
      %p29 = scmp.eq.s32.totalorder %s13, 3
      %p30 = por %p28, %p29
      %p31 = scmp.ne.s32.totalorder %s23, %s26
      %p32 = scmp.eq.s32.totalorder %s13, 0
      %p33 = por %p31, %p32
      %p34 = scmp.ne.s32.totalorder %s23, %s26
      %p35 = scmp.eq.s32.totalorder %s18, 3
      %p36 = por %p34, %p35
      %p37 = scmp.ne.s32.totalorder %s26, %s27
      %p38 = scmp.eq.s32.totalorder %s18, 0
      %p39 = por %p37, %p38
      %p40 = scmp.ne.s32.totalorder %s26, %s27
      %p41 = scmp.eq.s32.totalorder %s19, 3
      %p42 = por %p40, %p41
      %p44 = scmp.ne.s32.totalorder %s27, %s43
      %p45 = scmp.eq.s32.totalorder %s19, 0
      %p46 = por %p44, %p45
      %s47 = ssub.s32 %s13, %s20
      %p48 = scmp.eq.s32.totalorder %s47, 0
      %s50 = sadd.s32 %s49, 1
      %s51 = scalar_select %p48, %s49, %s50
      %p54 = pneg %p48
      %p55 = scmp.eq.s32.totalorder %s13, 3
      %p56 = por %p54, %p55
      %p57 = scmp.ne.s32.totalorder %s49, %s52
      %p58 = scmp.eq.s32.totalorder %s13, 0
      %p59 = por %p57, %p58
      %p60 = scmp.ne.s32.totalorder %s49, %s52
      %p61 = scmp.eq.s32.totalorder %s18, 3
      %p62 = por %p60, %p61
      %p63 = scmp.ne.s32.totalorder %s52, %s53
      %p64 = scmp.eq.s32.totalorder %s18, 0
      %p65 = por %p63, %p64
      %p66 = scmp.ne.s32.totalorder %s52, %s53
      %p67 = scmp.eq.s32.totalorder %s19, 3
      %p68 = por %p66, %p67
      %p70 = scmp.ne.s32.totalorder %s53, %s69
      %p71 = scmp.eq.s32.totalorder %s19, 0
      %p72 = por %p70, %p71
      %p73 = scmp.le.s32.totalorder 1, %s13
      %p74 = scmp.lt.s32.totalorder %s13, 5
      %p75 = pnand %p73, %p74
      %p76 = pneg %p75
      // Predicated region
      $region9: #{tpu_custom_call.1} parent=5 // pred_check
        _
      $region10: #{tpu_custom_call.1} parent=5 // pred_check_branch
        %78 = sbr.rel (%p75) target = $region12
      $region11: #{tpu_custom_call.1} parent=5 // pred_region
        %s79 = ssub.s32 %s13, 1
      $region12: #{tpu_custom_call.1} parent=5 // pred_fallthru
        _
      %p80 = scmp.lt.s32.totalorder %s13, 4
      // Predicated region
      $region13: #{tpu_custom_call.1} parent=5 // pred_check
        %p81 = pneg %p80
      $region14: #{tpu_custom_call.1} parent=5 // pred_check_branch
        %83 = sbr.rel (%p81) target = $region16
      $region15: #{tpu_custom_call.1} parent=5 // pred_region
        // Predicated region
        $region17: #{tpu_custom_call.1} parent=15 // pred_check
          %p84 = pneg %p33
        $region18: #{tpu_custom_call.1} parent=15 // pred_check_branch
          %86 = sbr.rel (%p84) target = $region20
        $region19: #{tpu_custom_call.1} parent=15 // pred_region
          %s87 = sand.u32 %s23, 1
          %s88 = scalar_lea.sflag [#allocation3], %s87
          %s89 = sand.u32 %s23, 1
          %s90 = smul.addr %s89, 576
          %s91 = scalar_lea.vmem [#allocation2], %s90
          %s92 = smul.u32 9, %s13
          %s93 = ssub.s32 33, %s92
          %p94 = scmp.lt.s32.totalorder %s93, 9
          %s95 = scalar_select %p94, %s93, 9
          %s96 = smul.u32 128, %s95
          %s97 = smul.u32 %s96, 8
          %s99 = ssub.s32 9216, %s97
          %100 = vsyncadd %s88, %s99
          %p101 = scmp.ne.s32.totalorder 0, %s97
          %s102 = smul.addr %s92, 8
          %s103 = smul.addr %s102, 128
          %s104 = scalar_lea.hbm %s0, %s103
          %s105 = smul.u32 64, %s95
          %s106 = sshll.u32 %s91, 4
          %s107 = int_to_ptr.vmem [resolvable:$true] %s106
          %s108 = sshll.u32 %s105, 4
          %112 = dma.hbm_to_vmem [thread:$0]  (%p101), %s104, %s108, %s107, %s88, 1024, 1024, 64
        $region20: #{tpu_custom_call.1} parent=15 // pred_fallthru
          _
      $region16: #{tpu_custom_call.1} parent=5 // pred_fallthru
        _
      %p113 = scmp.le.s32.totalorder 1, %s13
      %p114 = scmp.lt.s32.totalorder %s13, 5
      %p115 = pnand %p113, %p114
      %p116 = pneg %p115
      // Predicated region
      $region21: #{tpu_custom_call.1} parent=5 // pred_check
        _
      $region22: #{tpu_custom_call.1} parent=5 // pred_check_branch
        %118 = sbr.rel (%p115) target = $region24
      $region23: #{tpu_custom_call.1} parent=5 // pred_region
        %s119 = ssub.s32 %s13, 1
        %s120 = sand.u32 %s26, 1
        %s121 = scalar_lea.sflag [#allocation3], %s120
        %s122 = sand.u32 %s26, 1
        %s123 = smul.addr %s122, 576
        %s124 = scalar_lea.vmem [#allocation2], %s123
        // Predicated region
        $region25: #{tpu_custom_call.1} parent=23 // pred_check
          %p125 = pneg %p39
        $region26: #{tpu_custom_call.1} parent=23 // pred_check_branch
          %127 = sbr.rel (%p125) target = $region28
        $region27: #{tpu_custom_call.1} parent=23 // pred_region
          %128 = dma.done %s121, 9216
        $region28: #{tpu_custom_call.1} parent=23 // pred_fallthru
          _
        %s129 = sand.u32 %s26, 1
        %s130 = scalar_lea.sflag [#allocation3], %s129
        %s131 = sand.u32 %s26, 1
        %s132 = smul.addr %s131, 576
        %s133 = scalar_lea.vmem [#allocation2], %s132
        %p134 = pneg %p39
        %p135 = pneg %p36
        %p136 = pneg %p65
        %p137 = pneg %p62
        %s138 = sand.u32 %s52, 1
        %s139 = scalar_lea.sflag [#allocation4], %s138
        %s140 = sand.u32 %s52, 1
        %s141 = smul.addr %s140, 576
        %s142 = scalar_lea.vmem [#allocation5], %s141
        %s143 = smul.u32 9, %s18
        %s144 = ssub.s32 33, %s143
        %p145 = scmp.lt.s32.totalorder %s144, 9
        %s146 = scalar_select %p145, %s144, 9
        %s147 = smul.u32 128, %s146
        %s148 = smul.u32 %s147, 8
        %s149 = smul.u32 9, %s18
        %s150 = ssub.s32 33, %s149
        %p151 = scmp.lt.s32.totalorder %s150, 9
        %s152 = scalar_select %p151, %s150, 9
        %s153 = smul.u32 128, %s152
        %s154 = smul.u32 %s153, 8
        %v155 = vld [vmem:[%s124] sm:$0xff]
        %v156 = vld [vmem:[%s124 + $0x8] sm:$0xff]
        %v157 = vld [vmem:[%s124 + $0x10] sm:$0xff]
        %v158 = vld [vmem:[%s124 + $0x18] sm:$0xff]
        %v159 = vld [vmem:[%s124 + $0x20] sm:$0xff]
        %v160 = vld [vmem:[%s124 + $0x28] sm:$0xff]
        %v161 = vld [vmem:[%s124 + $0x30] sm:$0xff]
        %v162 = vld [vmem:[%s124 + $0x38] sm:$0xff]
        %v163 = vld [vmem:[%s124 + $0x40] sm:$0xff]
        %v164 = vld [vmem:[%s124 + $0x48] sm:$0xff]
        %v165 = vld [vmem:[%s124 + $0x50] sm:$0xff]
        %v166 = vld [vmem:[%s124 + $0x58] sm:$0xff]
        %v167 = vld [vmem:[%s124 + $0x60] sm:$0xff]
        %v168 = vld [vmem:[%s124 + $0x68] sm:$0xff]
        %v169 = vld [vmem:[%s124 + $0x70] sm:$0xff]
        %v170 = vld [vmem:[%s124 + $0x78] sm:$0xff]
        %v171 = vld [vmem:[%s124 + $0x80] sm:$0xff]
        %v172 = vld [vmem:[%s124 + $0x88] sm:$0xff]
        %v173 = vld [vmem:[%s124 + $0x90] sm:$0xff]
        %v174 = vld [vmem:[%s124 + $0x98] sm:$0xff]
        %v175 = vld [vmem:[%s124 + $0xa0] sm:$0xff]
        %v176 = vld [vmem:[%s124 + $0xa8] sm:$0xff]
        %v177 = vld [vmem:[%s124 + $0xb0] sm:$0xff]
        %v178 = vld [vmem:[%s124 + $0xb8] sm:$0xff]
        %v179 = vld [vmem:[%s124 + $0xc0] sm:$0xff]
        %v180 = vld [vmem:[%s124 + $0xc8] sm:$0xff]
        %v181 = vld [vmem:[%s124 + $0xd0] sm:$0xff]
        %v182 = vld [vmem:[%s124 + $0xd8] sm:$0xff]
        %v183 = vld [vmem:[%s124 + $0xe0] sm:$0xff]
        %v184 = vld [vmem:[%s124 + $0xe8] sm:$0xff]
        %v185 = vld [vmem:[%s124 + $0xf0] sm:$0xff]
        %v186 = vld [vmem:[%s124 + $0xf8] sm:$0xff]
        %v187 = vld [vmem:[%s124 + $0x100] sm:$0xff]
        %v188 = vld [vmem:[%s124 + $0x108] sm:$0xff]
        %v189 = vld [vmem:[%s124 + $0x110] sm:$0xff]
        %v190 = vld [vmem:[%s124 + $0x118] sm:$0xff]
        %v191 = vld [vmem:[%s124 + $0x120] sm:$0xff]
        %v192 = vld [vmem:[%s124 + $0x128] sm:$0xff]
        %v193 = vld [vmem:[%s124 + $0x130] sm:$0xff]
        %v194 = vld [vmem:[%s124 + $0x138] sm:$0xff]
        %v195 = vld [vmem:[%s124 + $0x140] sm:$0xff]
        %v196 = vld [vmem:[%s124 + $0x148] sm:$0xff]
        %v197 = vld [vmem:[%s124 + $0x150] sm:$0xff]
        %v198 = vld [vmem:[%s124 + $0x158] sm:$0xff]
        %v199 = vld [vmem:[%s124 + $0x160] sm:$0xff]
        %v200 = vld [vmem:[%s124 + $0x168] sm:$0xff]
        %v201 = vld [vmem:[%s124 + $0x170] sm:$0xff]
        %v202 = vld [vmem:[%s124 + $0x178] sm:$0xff]
        %v203 = vld [vmem:[%s124 + $0x180] sm:$0xff]
        %v204 = vld [vmem:[%s124 + $0x188] sm:$0xff]
        %v205 = vld [vmem:[%s124 + $0x190] sm:$0xff]
        %v206 = vld [vmem:[%s124 + $0x198] sm:$0xff]
        %v207 = vld [vmem:[%s124 + $0x1a0] sm:$0xff]
        %v208 = vld [vmem:[%s124 + $0x1a8] sm:$0xff]
        %v209 = vld [vmem:[%s124 + $0x1b0] sm:$0xff]
        %v210 = vld [vmem:[%s124 + $0x1b8] sm:$0xff]
        %v211 = vld [vmem:[%s124 + $0x1c0] sm:$0xff]
        %v212 = vld [vmem:[%s124 + $0x1c8] sm:$0xff]
        %v213 = vld [vmem:[%s124 + $0x1d0] sm:$0xff]
        %v214 = vld [vmem:[%s124 + $0x1d8] sm:$0xff]
        %v215 = vld [vmem:[%s124 + $0x1e0] sm:$0xff]
        %v216 = vld [vmem:[%s124 + $0x1e8] sm:$0xff]
        %v217 = vld [vmem:[%s124 + $0x1f0] sm:$0xff]
        %v218 = vld [vmem:[%s124 + $0x1f8] sm:$0xff]
        %v219 = vld [vmem:[%s124 + $0x200] sm:$0xff]
        %v220 = vld [vmem:[%s124 + $0x208] sm:$0xff]
        %v221 = vld [vmem:[%s124 + $0x210] sm:$0xff]
        %v222 = vld [vmem:[%s124 + $0x218] sm:$0xff]
        %v223 = vld [vmem:[%s124 + $0x220] sm:$0xff]
        %v224 = vld [vmem:[%s124 + $0x228] sm:$0xff]
        %v225 = vld [vmem:[%s124 + $0x230] sm:$0xff]
        %v226 = vld [vmem:[%s124 + $0x238] sm:$0xff]
        %v227 = vmul.f32 %v155, 0.5
        %v228 = vmul.f32 %v156, 0.5
        %v229 = vmul.f32 %v157, 0.5
        %v230 = vmul.f32 %v158, 0.5
        %v231 = vmul.f32 %v159, 0.5
        %v232 = vmul.f32 %v160, 0.5
        %v233 = vmul.f32 %v161, 0.5
        %v234 = vmul.f32 %v162, 0.5
        %v235 = vmul.f32 %v163, 0.5
        %v236 = vmul.f32 %v164, 0.5
        %v237 = vmul.f32 %v165, 0.5
        %v238 = vmul.f32 %v166, 0.5
        %v239 = vmul.f32 %v167, 0.5
        %v240 = vmul.f32 %v168, 0.5
        %v241 = vmul.f32 %v169, 0.5
        %v242 = vmul.f32 %v170, 0.5
        %v243 = vmul.f32 %v171, 0.5
        %v244 = vmul.f32 %v172, 0.5
        %v245 = vmul.f32 %v173, 0.5
        %v246 = vmul.f32 %v174, 0.5
        %v247 = vmul.f32 %v175, 0.5
        %v248 = vmul.f32 %v176, 0.5
        %v249 = vmul.f32 %v177, 0.5
        %v250 = vmul.f32 %v178, 0.5
        %v251 = vmul.f32 %v179, 0.5
        %v252 = vmul.f32 %v180, 0.5
        %v253 = vmul.f32 %v181, 0.5
        %v254 = vmul.f32 %v182, 0.5
        %v255 = vmul.f32 %v183, 0.5
        %v256 = vmul.f32 %v184, 0.5
        %v257 = vmul.f32 %v185, 0.5
        %v258 = vmul.f32 %v186, 0.5
        %v259 = vmul.f32 %v187, 0.5
        %v260 = vmul.f32 %v188, 0.5
        %v261 = vmul.f32 %v189, 0.5
        %v262 = vmul.f32 %v190, 0.5
        %v263 = vmul.f32 %v191, 0.5
        %v264 = vmul.f32 %v192, 0.5
        %v265 = vmul.f32 %v193, 0.5
        %v266 = vmul.f32 %v194, 0.5
        %v267 = vmul.f32 %v195, 0.5
        %v268 = vmul.f32 %v196, 0.5
        %v269 = vmul.f32 %v197, 0.5
        %v270 = vmul.f32 %v198, 0.5
        %v271 = vmul.f32 %v199, 0.5
        %v272 = vmul.f32 %v200, 0.5
        %v273 = vmul.f32 %v201, 0.5
        %v274 = vmul.f32 %v202, 0.5
        %v275 = vmul.f32 %v203, 0.5
        %v276 = vmul.f32 %v204, 0.5
        %v277 = vmul.f32 %v205, 0.5
        %v278 = vmul.f32 %v206, 0.5
        %v279 = vmul.f32 %v207, 0.5
        %v280 = vmul.f32 %v208, 0.5
        %v281 = vmul.f32 %v209, 0.5
        %v282 = vmul.f32 %v210, 0.5
        %v283 = vmul.f32 %v211, 0.5
        %v284 = vmul.f32 %v212, 0.5
        %v285 = vmul.f32 %v213, 0.5
        %v286 = vmul.f32 %v214, 0.5
        %v287 = vmul.f32 %v215, 0.5
        %v288 = vmul.f32 %v216, 0.5
        %v289 = vmul.f32 %v217, 0.5
        %v290 = vmul.f32 %v218, 0.5
        %v291 = vmul.f32 %v219, 0.5
        %v292 = vmul.f32 %v220, 0.5
        %v293 = vmul.f32 %v221, 0.5
        %v294 = vmul.f32 %v222, 0.5
        %v295 = vmul.f32 %v223, 0.5
        %v296 = vmul.f32 %v224, 0.5
        %v297 = vmul.f32 %v225, 0.5
        %v298 = vmul.f32 %v226, 0.5
        %v299 = vtanh.pop %v227
        %v300 = vtanh.pop %v228
        %v301 = vtanh.pop %v229
        %v302 = vtanh.pop %v230
        %v303 = vtanh.pop %v231
        %v304 = vtanh.pop %v232
        %v305 = vtanh.pop %v233
        %v306 = vtanh.pop %v234
        %v307 = vtanh.pop %v235
        %v308 = vtanh.pop %v236
        %v309 = vtanh.pop %v237
        %v310 = vtanh.pop %v238
        %v311 = vtanh.pop %v239
        %v312 = vtanh.pop %v240
        %v313 = vtanh.pop %v241
        %v314 = vtanh.pop %v242
        %v315 = vtanh.pop %v243
        %v316 = vtanh.pop %v244
        %v317 = vtanh.pop %v245
        %v318 = vtanh.pop %v246
        %v319 = vtanh.pop %v247
        %v320 = vtanh.pop %v248
        %v321 = vtanh.pop %v249
        %v322 = vtanh.pop %v250
        %v323 = vtanh.pop %v251
        %v324 = vtanh.pop %v252
        %v325 = vtanh.pop %v253
        %v326 = vtanh.pop %v254
        %v327 = vtanh.pop %v255
        %v328 = vtanh.pop %v256
        %v329 = vtanh.pop %v257
        %v330 = vtanh.pop %v258
        %v331 = vtanh.pop %v259
        %v332 = vtanh.pop %v260
        %v333 = vtanh.pop %v261
        %v334 = vtanh.pop %v262
        %v335 = vtanh.pop %v263
        %v336 = vtanh.pop %v264
        %v337 = vtanh.pop %v265
        %v338 = vtanh.pop %v266
        %v339 = vtanh.pop %v267
        %v340 = vtanh.pop %v268
        %v341 = vtanh.pop %v269
        %v342 = vtanh.pop %v270
        %v343 = vtanh.pop %v271
        %v344 = vtanh.pop %v272
        %v345 = vtanh.pop %v273
        %v346 = vtanh.pop %v274
        %v347 = vtanh.pop %v275
        %v348 = vtanh.pop %v276
        %v349 = vtanh.pop %v277
        %v350 = vtanh.pop %v278
        %v351 = vtanh.pop %v279
        %v352 = vtanh.pop %v280
        %v353 = vtanh.pop %v281
        %v354 = vtanh.pop %v282
        %v355 = vtanh.pop %v283
        %v356 = vtanh.pop %v284
        %v357 = vtanh.pop %v285
        %v358 = vtanh.pop %v286
        %v359 = vtanh.pop %v287
        %v360 = vtanh.pop %v288
        %v361 = vtanh.pop %v289
        %v362 = vtanh.pop %v290
        %v363 = vtanh.pop %v291
        %v364 = vtanh.pop %v292
        %v365 = vtanh.pop %v293
        %v366 = vtanh.pop %v294
        %v367 = vtanh.pop %v295
        %v368 = vtanh.pop %v296
        %v369 = vtanh.pop %v297
        %v370 = vtanh.pop %v298
        %v371 = vadd.f32 %v299, 1.0
        %v372 = vadd.f32 %v300, 1.0
        %v373 = vadd.f32 %v301, 1.0
        %v374 = vadd.f32 %v302, 1.0
        %v375 = vadd.f32 %v303, 1.0
        %v376 = vadd.f32 %v304, 1.0
        %v377 = vadd.f32 %v305, 1.0
        %v378 = vadd.f32 %v306, 1.0
        %v379 = vadd.f32 %v307, 1.0
        %v380 = vadd.f32 %v308, 1.0
        %v381 = vadd.f32 %v309, 1.0
        %v382 = vadd.f32 %v310, 1.0
        %v383 = vadd.f32 %v311, 1.0
        %v384 = vadd.f32 %v312, 1.0
        %v385 = vadd.f32 %v313, 1.0
        %v386 = vadd.f32 %v314, 1.0
        %v387 = vadd.f32 %v315, 1.0
        %v388 = vadd.f32 %v316, 1.0
        %v389 = vadd.f32 %v317, 1.0
        %v390 = vadd.f32 %v318, 1.0
        %v391 = vadd.f32 %v319, 1.0
        %v392 = vadd.f32 %v320, 1.0
        %v393 = vadd.f32 %v321, 1.0
        %v394 = vadd.f32 %v322, 1.0
        %v395 = vadd.f32 %v323, 1.0
        %v396 = vadd.f32 %v324, 1.0
        %v397 = vadd.f32 %v325, 1.0
        %v398 = vadd.f32 %v326, 1.0
        %v399 = vadd.f32 %v327, 1.0
        %v400 = vadd.f32 %v328, 1.0
        %v401 = vadd.f32 %v329, 1.0
        %v402 = vadd.f32 %v330, 1.0
        %v403 = vadd.f32 %v331, 1.0
        %v404 = vadd.f32 %v332, 1.0
        %v405 = vadd.f32 %v333, 1.0
        %v406 = vadd.f32 %v334, 1.0
        %v407 = vadd.f32 %v335, 1.0
        %v408 = vadd.f32 %v336, 1.0
        %v409 = vadd.f32 %v337, 1.0
        %v410 = vadd.f32 %v338, 1.0
        %v411 = vadd.f32 %v339, 1.0
        %v412 = vadd.f32 %v340, 1.0
        %v413 = vadd.f32 %v341, 1.0
        %v414 = vadd.f32 %v342, 1.0
        %v415 = vadd.f32 %v343, 1.0
        %v416 = vadd.f32 %v344, 1.0
        %v417 = vadd.f32 %v345, 1.0
        %v418 = vadd.f32 %v346, 1.0
        %v419 = vadd.f32 %v347, 1.0
        %v420 = vadd.f32 %v348, 1.0
        %v421 = vadd.f32 %v349, 1.0
        %v422 = vadd.f32 %v350, 1.0
        %v423 = vadd.f32 %v351, 1.0
        %v424 = vadd.f32 %v352, 1.0
        %v425 = vadd.f32 %v353, 1.0
        %v426 = vadd.f32 %v354, 1.0
        %v427 = vadd.f32 %v355, 1.0
        %v428 = vadd.f32 %v356, 1.0
        %v429 = vadd.f32 %v357, 1.0
        %v430 = vadd.f32 %v358, 1.0
        %v431 = vadd.f32 %v359, 1.0
        %v432 = vadd.f32 %v360, 1.0
        %v433 = vadd.f32 %v361, 1.0
        %v434 = vadd.f32 %v362, 1.0
        %v435 = vadd.f32 %v363, 1.0
        %v436 = vadd.f32 %v364, 1.0
        %v437 = vadd.f32 %v365, 1.0
        %v438 = vadd.f32 %v366, 1.0
        %v439 = vadd.f32 %v367, 1.0
        %v440 = vadd.f32 %v368, 1.0
        %v441 = vadd.f32 %v369, 1.0
        %v442 = vadd.f32 %v370, 1.0
        %v443 = vmul.f32 %v371, 0.5
        %v444 = vmul.f32 %v372, 0.5
        %v445 = vmul.f32 %v373, 0.5
        %v446 = vmul.f32 %v374, 0.5
        %v447 = vmul.f32 %v375, 0.5
        %v448 = vmul.f32 %v376, 0.5
        %v449 = vmul.f32 %v377, 0.5
        %v450 = vmul.f32 %v378, 0.5
        %v451 = vmul.f32 %v379, 0.5
        %v452 = vmul.f32 %v380, 0.5
        %v453 = vmul.f32 %v381, 0.5
        %v454 = vmul.f32 %v382, 0.5
        %v455 = vmul.f32 %v383, 0.5
        %v456 = vmul.f32 %v384, 0.5
        %v457 = vmul.f32 %v385, 0.5
        %v458 = vmul.f32 %v386, 0.5
        %v459 = vmul.f32 %v387, 0.5
        %v460 = vmul.f32 %v388, 0.5
        %v461 = vmul.f32 %v389, 0.5
        %v462 = vmul.f32 %v390, 0.5
        %v463 = vmul.f32 %v391, 0.5
        %v464 = vmul.f32 %v392, 0.5
        %v465 = vmul.f32 %v393, 0.5
        %v466 = vmul.f32 %v394, 0.5
        %v467 = vmul.f32 %v395, 0.5
        %v468 = vmul.f32 %v396, 0.5
        %v469 = vmul.f32 %v397, 0.5
        %v470 = vmul.f32 %v398, 0.5
        %v471 = vmul.f32 %v399, 0.5
        %v472 = vmul.f32 %v400, 0.5
        %v473 = vmul.f32 %v401, 0.5
        %v474 = vmul.f32 %v402, 0.5
        %v475 = vmul.f32 %v403, 0.5
        %v476 = vmul.f32 %v404, 0.5
        %v477 = vmul.f32 %v405, 0.5
        %v478 = vmul.f32 %v406, 0.5
        %v479 = vmul.f32 %v407, 0.5
        %v480 = vmul.f32 %v408, 0.5
        %v481 = vmul.f32 %v409, 0.5
        %v482 = vmul.f32 %v410, 0.5
        %v483 = vmul.f32 %v411, 0.5
        %v484 = vmul.f32 %v412, 0.5
        %v485 = vmul.f32 %v413, 0.5
        %v486 = vmul.f32 %v414, 0.5
        %v487 = vmul.f32 %v415, 0.5
        %v488 = vmul.f32 %v416, 0.5
        %v489 = vmul.f32 %v417, 0.5
        %v490 = vmul.f32 %v418, 0.5
        %v491 = vmul.f32 %v419, 0.5
        %v492 = vmul.f32 %v420, 0.5
        %v493 = vmul.f32 %v421, 0.5
        %v494 = vmul.f32 %v422, 0.5
        %v495 = vmul.f32 %v423, 0.5
        %v496 = vmul.f32 %v424, 0.5
        %v497 = vmul.f32 %v425, 0.5
        %v498 = vmul.f32 %v426, 0.5
        %v499 = vmul.f32 %v427, 0.5
        %v500 = vmul.f32 %v428, 0.5
        %v501 = vmul.f32 %v429, 0.5
        %v502 = vmul.f32 %v430, 0.5
        %v503 = vmul.f32 %v431, 0.5
        %v504 = vmul.f32 %v432, 0.5
        %v505 = vmul.f32 %v433, 0.5
        %v506 = vmul.f32 %v434, 0.5
        %v507 = vmul.f32 %v435, 0.5
        %v508 = vmul.f32 %v436, 0.5
        %v509 = vmul.f32 %v437, 0.5
        %v510 = vmul.f32 %v438, 0.5
        %v511 = vmul.f32 %v439, 0.5
        %v512 = vmul.f32 %v440, 0.5
        %v513 = vmul.f32 %v441, 0.5
        %v514 = vmul.f32 %v442, 0.5
        %515 = vst [vmem:[%s142] sm:$0xff] %v443
        %516 = vst [vmem:[%s142 + $0x8] sm:$0xff] %v444
        %517 = vst [vmem:[%s142 + $0x10] sm:$0xff] %v445
        %518 = vst [vmem:[%s142 + $0x18] sm:$0xff] %v446
        %519 = vst [vmem:[%s142 + $0x20] sm:$0xff] %v447
        %520 = vst [vmem:[%s142 + $0x28] sm:$0xff] %v448
        %521 = vst [vmem:[%s142 + $0x30] sm:$0xff] %v449
        %522 = vst [vmem:[%s142 + $0x38] sm:$0xff] %v450
        %523 = vst [vmem:[%s142 + $0x40] sm:$0xff] %v451
        %524 = vst [vmem:[%s142 + $0x48] sm:$0xff] %v452
        %525 = vst [vmem:[%s142 + $0x50] sm:$0xff] %v453
        %526 = vst [vmem:[%s142 + $0x58] sm:$0xff] %v454
        %527 = vst [vmem:[%s142 + $0x60] sm:$0xff] %v455
        %528 = vst [vmem:[%s142 + $0x68] sm:$0xff] %v456
        %529 = vst [vmem:[%s142 + $0x70] sm:$0xff] %v457
        %530 = vst [vmem:[%s142 + $0x78] sm:$0xff] %v458
        %531 = vst [vmem:[%s142 + $0x80] sm:$0xff] %v459
        %532 = vst [vmem:[%s142 + $0x88] sm:$0xff] %v460
        %533 = vst [vmem:[%s142 + $0x90] sm:$0xff] %v461
        %534 = vst [vmem:[%s142 + $0x98] sm:$0xff] %v462
        %535 = vst [vmem:[%s142 + $0xa0] sm:$0xff] %v463
        %536 = vst [vmem:[%s142 + $0xa8] sm:$0xff] %v464
        %537 = vst [vmem:[%s142 + $0xb0] sm:$0xff] %v465
        %538 = vst [vmem:[%s142 + $0xb8] sm:$0xff] %v466
        %539 = vst [vmem:[%s142 + $0xc0] sm:$0xff] %v467
        %540 = vst [vmem:[%s142 + $0xc8] sm:$0xff] %v468
        %541 = vst [vmem:[%s142 + $0xd0] sm:$0xff] %v469
        %542 = vst [vmem:[%s142 + $0xd8] sm:$0xff] %v470
        %543 = vst [vmem:[%s142 + $0xe0] sm:$0xff] %v471
        %544 = vst [vmem:[%s142 + $0xe8] sm:$0xff] %v472
        %545 = vst [vmem:[%s142 + $0xf0] sm:$0xff] %v473
        %546 = vst [vmem:[%s142 + $0xf8] sm:$0xff] %v474
        %547 = vst [vmem:[%s142 + $0x100] sm:$0xff] %v475
        %548 = vst [vmem:[%s142 + $0x108] sm:$0xff] %v476
        %549 = vst [vmem:[%s142 + $0x110] sm:$0xff] %v477
        %550 = vst [vmem:[%s142 + $0x118] sm:$0xff] %v478
        %551 = vst [vmem:[%s142 + $0x120] sm:$0xff] %v479
        %552 = vst [vmem:[%s142 + $0x128] sm:$0xff] %v480
        %553 = vst [vmem:[%s142 + $0x130] sm:$0xff] %v481
        %554 = vst [vmem:[%s142 + $0x138] sm:$0xff] %v482
        %555 = vst [vmem:[%s142 + $0x140] sm:$0xff] %v483
        %556 = vst [vmem:[%s142 + $0x148] sm:$0xff] %v484
        %557 = vst [vmem:[%s142 + $0x150] sm:$0xff] %v485
        %558 = vst [vmem:[%s142 + $0x158] sm:$0xff] %v486
        %559 = vst [vmem:[%s142 + $0x160] sm:$0xff] %v487
        %560 = vst [vmem:[%s142 + $0x168] sm:$0xff] %v488
        %561 = vst [vmem:[%s142 + $0x170] sm:$0xff] %v489
        %562 = vst [vmem:[%s142 + $0x178] sm:$0xff] %v490
        %563 = vst [vmem:[%s142 + $0x180] sm:$0xff] %v491
        %564 = vst [vmem:[%s142 + $0x188] sm:$0xff] %v492
        %565 = vst [vmem:[%s142 + $0x190] sm:$0xff] %v493
        %566 = vst [vmem:[%s142 + $0x198] sm:$0xff] %v494
        %567 = vst [vmem:[%s142 + $0x1a0] sm:$0xff] %v495
        %568 = vst [vmem:[%s142 + $0x1a8] sm:$0xff] %v496
        %569 = vst [vmem:[%s142 + $0x1b0] sm:$0xff] %v497
        %570 = vst [vmem:[%s142 + $0x1b8] sm:$0xff] %v498
        %571 = vst [vmem:[%s142 + $0x1c0] sm:$0xff] %v499
        %572 = vst [vmem:[%s142 + $0x1c8] sm:$0xff] %v500
        %573 = vst [vmem:[%s142 + $0x1d0] sm:$0xff] %v501
        %574 = vst [vmem:[%s142 + $0x1d8] sm:$0xff] %v502
        %575 = vst [vmem:[%s142 + $0x1e0] sm:$0xff] %v503
        %576 = vst [vmem:[%s142 + $0x1e8] sm:$0xff] %v504
        %577 = vst [vmem:[%s142 + $0x1f0] sm:$0xff] %v505
        %578 = vst [vmem:[%s142 + $0x1f8] sm:$0xff] %v506
        %579 = vst [vmem:[%s142 + $0x200] sm:$0xff] %v507
        %580 = vst [vmem:[%s142 + $0x208] sm:$0xff] %v508
        %581 = vst [vmem:[%s142 + $0x210] sm:$0xff] %v509
        %582 = vst [vmem:[%s142 + $0x218] sm:$0xff] %v510
        %583 = vst [vmem:[%s142 + $0x220] sm:$0xff] %v511
        %584 = vst [vmem:[%s142 + $0x228] sm:$0xff] %v512
        %585 = vst [vmem:[%s142 + $0x230] sm:$0xff] %v513
        %586 = vst [vmem:[%s142 + $0x238] sm:$0xff] %v514
        %s587 = sand.u32 %s52, 1
        %s588 = scalar_lea.sflag [#allocation4], %s587
        %s589 = sand.u32 %s52, 1
        %s590 = smul.addr %s589, 576
        %s591 = scalar_lea.vmem [#allocation5], %s590
        // Predicated region
        $region29: #{tpu_custom_call.1} parent=23 // pred_check
          %p592 = pneg %p62
        $region30: #{tpu_custom_call.1} parent=23 // pred_check_branch
          %594 = sbr.rel (%p592) target = $region32
        $region31: #{tpu_custom_call.1} parent=23 // pred_region
          %s595 = smul.u32 9, %s18
          %s596 = ssub.s32 33, %s595
          %p597 = scmp.lt.s32.totalorder %s596, 9
          %s598 = scalar_select %p597, %s596, 9
          %s599 = smul.u32 128, %s598
          %s600 = smul.u32 %s599, 8
          %s602 = ssub.s32 9216, %s600
          %603 = vsyncadd %s588, %s602
          %p604 = scmp.ne.s32.totalorder 0, %s600
          %s605 = smul.addr %s595, 8
          %s606 = smul.addr %s605, 128
          %s607 = scalar_lea.hbm %s1, %s606
          %s608 = smul.u32 64, %s598
          %s609 = sshll.u32 %s591, 4
          %s610 = int_to_ptr.vmem [resolvable:$true] %s609
          %s611 = sshll.u32 %s608, 4
          %615 = dma.vmem_to_hbm [thread:$0]  (%p604), %s610, %s611, %s607, %s588, 1024, 1024, 64
        $region32: #{tpu_custom_call.1} parent=23 // pred_fallthru
          _
      $region24: #{tpu_custom_call.1} parent=5 // pred_fallthru
        _
      %p616 = scmp.le.s32.totalorder 2, %s13
      // Predicated region
      $region33: #{tpu_custom_call.1} parent=5 // pred_check
        %p617 = pneg %p616
      $region34: #{tpu_custom_call.1} parent=5 // pred_check_branch
        %619 = sbr.rel (%p617) target = $region36
      $region35: #{tpu_custom_call.1} parent=5 // pred_region
        %s620 = ssub.s32 %s13, 2
        // Predicated region
        $region37: #{tpu_custom_call.1} parent=35 // pred_check
          %p621 = pneg %p68
        $region38: #{tpu_custom_call.1} parent=35 // pred_check_branch
          %623 = sbr.rel (%p621) target = $region40
        $region39: #{tpu_custom_call.1} parent=35 // pred_region
          %s624 = sand.u32 %s53, 1
          %s625 = scalar_lea.sflag [#allocation4], %s624
          %s626 = sand.u32 %s53, 1
          %s627 = smul.addr %s626, 576
          %s628 = scalar_lea.vmem [#allocation5], %s627
          %629 = dma.done %s625, 9216
        $region40: #{tpu_custom_call.1} parent=35 // pred_fallthru
          _
      $region36: #{tpu_custom_call.1} parent=5 // pred_fallthru
        _
    $region6: #{tpu_custom_call.1} parent=1 // loop_footer
      %s17 = sadd.s32 1, %s13
    $region7: #{tpu_custom_call.1} parent=1 // loop_footer_branch
      %12 = sbr.rel target = $region3
    $region8: #{tpu_custom_call.1} parent=1 // loop_exit
      _
    %630 = vsyncpa [#allocation3], 1
    %s631 = scalar_lea.sflag [#allocation3], 1
    %632 = vsyncpa %s631, 1
    %633 = vsyncpa [#allocation4], 1
    %s634 = scalar_lea.sflag [#allocation4], 1
    %635 = vsyncpa %s634, 1

</llo_original>
